<compile_context>
chip_gen: v7x
topology: tpu7x:2x2x1
jax: 0.10.0
libtpu: 0.0.40
codegen_flags: <defaults>
</compile_context>

<pallas_src>
import functools

import jax
import jax.numpy as jnp
from jax.experimental import pallas as pl
from jax.experimental.pallas import tpu as pltpu

IN_FEATURES = 84
OUT_FEATURES = 62
N_PAD = 128       # lane-aligned padded output width used *inside* the kernel only
NEG_FILL = -1e30  # padded-logit fill so log-sum-exp ignores columns 62..127


def _layer6_kernel(x_ref, w_ref, b_ref, o_ref):
    # x: [TB, 84], w: [84, 128] (pre-transposed [K, N], N zero-padded),
    # b: [1, 128] (padded lanes = NEG_FILL), o: [TB, 62]
    x = x_ref[...]
    w = w_ref[...]
    b = b_ref[...]

    # Linear: one MXU pass with f32 accumulation (Mosaic masks the K=84 padding).
    logits = jnp.dot(x, w, preferred_element_type=jnp.float32) + b   # (TB, 128)

    # Numerically-stable log_softmax along the feature (last) axis == dim=1.
    # Padded lanes carry -1e30 bias, so they never win the max and exp() -> 0.
    m = jnp.max(logits, axis=-1, keepdims=True)
    shifted = logits - m
    p = jnp.exp(shifted)
    # Row-sum on the (otherwise idle) MXU instead of the XLU.
    ones_col = jnp.ones((N_PAD, 1), jnp.float32)
    lse = jnp.log(jnp.dot(p, ones_col, preferred_element_type=jnp.float32))
    out = shifted - lse                                              # (TB, 128)

    # Store only the 62 real columns (masked store); padded lanes never hit HBM.
    o_ref[...] = out[:, :OUT_FEATURES].astype(o_ref.dtype)


def _round_up(a, m):
    return ((a + m - 1) // m) * m


@functools.partial(jax.jit, static_argnames=("tb_cap",))
def layer6_forward(x, w, b, *, tb_cap: int = 1024):
    """x: [B, 84], w: [62, 84], b: [62] -> [B, 62] f32 (log-probs)."""
    B, K = x.shape
    OUT = w.shape[0]

    # --- tiny (constant-foldable) parameter repacking on the XLA side ---
    # Pre-transposed weight, zero-padded along N only: [84, 128].
    w_t = jnp.zeros((K, N_PAD), jnp.float32).at[:, :OUT].set(w.T.astype(jnp.float32))
    # Bias padded with a large negative so padded output lanes vanish in the LSE.
    b_pad = jnp.full((1, N_PAD), NEG_FILL, jnp.float32).at[0, :OUT].set(
        b.astype(jnp.float32))

    # --- batch tiling (no data copies; x and the output stay at their real shapes) ---
    if B <= 8:
        TB = B                                   # single block == full array dims
    else:
        B8 = _round_up(B, 8)
        n_steps = pl.cdiv(B8, tb_cap)
        if n_steps < 2:
            n_steps = 2                          # >=2 steps so v7x's 2 TCs both work
        elif n_steps % 2:
            n_steps += 1                         # even step count -> balanced tiles
        TB = _round_up(pl.cdiv(B8, n_steps), 8)  # sublane multiple
    grid = (pl.cdiv(B, TB),)

    out = pl.pallas_call(
        _layer6_kernel,
        out_shape=jax.ShapeDtypeStruct((B, OUT), jnp.float32),
        grid=grid,
        in_specs=[
            pl.BlockSpec((TB, K), lambda i: (i, 0)),        # x tile per step (K=84 ok: full dim)
            pl.BlockSpec((K, N_PAD), lambda i: (0, 0)),     # weight VMEM-resident
            pl.BlockSpec((1, N_PAD), lambda i: (0, 0)),     # bias VMEM-resident
        ],
        out_specs=pl.BlockSpec((TB, OUT), lambda i: (i, 0)),  # 62 == full last dim
        compiler_params=pltpu.CompilerParams(
            dimension_semantics=("parallel",)),
        cost_estimate=pl.CostEstimate(
            flops=2 * B * K * N_PAD + 2 * B * N_PAD,
            transcendentals=B * (N_PAD + 1),
            bytes_accessed=(B * K + K * N_PAD + N_PAD + B * OUT) * 4,
        ),
    )(x.astype(jnp.float32), w_t, b_pad)

    return out


if __name__ == "__main__":
    key = jax.random.PRNGKey(0)
    k_x, k_w, k_b, k_x2 = jax.random.split(key, 4)

    IN, OUT = IN_FEATURES, OUT_FEATURES
    # Deterministic parameter init (mimics nn.Linear's uniform(-1/sqrt(in), 1/sqrt(in)))
    bound = 1.0 / jnp.sqrt(jnp.float32(IN))
    w = jax.random.uniform(k_w, (OUT, IN), minval=-bound, maxval=bound, dtype=jnp.float32)
    b = jax.random.uniform(k_b, (OUT,), minval=-bound, maxval=bound, dtype=jnp.float32)

    ok = True
    # B=2: tiny-batch single-block path; B=37: ragged last block + 2-step grid path.
    for B, kk in ((2, k_x), (37, k_x2)):
        x = jax.random.normal(kk, (B, IN), dtype=jnp.float32)
        out = layer6_forward(x, w, b)
        jax.block_until_ready(out)

        ref = jax.nn.log_softmax(x @ w.T + b, axis=1)
        ok &= out.shape == (B, OUT)
        ok &= bool(jnp.allclose(out, ref, atol=1e-5, rtol=1e-5))

    assert ok
    print("KERNEL_OK")
</pallas_src>

<mosaic_0001>
module attributes {stable_mosaic.version = 11 : i64} {
  func.func @_layer6_kernel(%arg0: i32, %arg1: memref<2x84xf32, #tpu.memory_space<vmem>>, %arg2: memref<84x128xf32, #tpu.memory_space<vmem>>, %arg3: memref<1x128xf32, #tpu.memory_space<vmem>>, %arg4: memref<2x62xf32, #tpu.memory_space<vmem>>) attributes {dimension_semantics = [#tpu.dimension_semantics<parallel>], iteration_bounds = array<i64: 1>, scalar_prefetch = 0 : i64, scratch_operands = 0 : i64, tpu.core_type = #tpu.core_type<tc>, window_params = [{transform_indices = @transform_0, window_bounds = array<i64: 2, 84>}, {pipeline_mode = #tpu.pipeline_mode<synchronous>, transform_indices = @transform_1, window_bounds = array<i64: 84, 128>}, {pipeline_mode = #tpu.pipeline_mode<synchronous>, transform_indices = @transform_2, window_bounds = array<i64: 1, 128>}, {transform_indices = @transform_3, window_bounds = array<i64: 2, 62>}]} {
    %c0 = arith.constant 0 : index
    %c0_0 = arith.constant 0 : index
    %0 = vector.load %arg1[%c0, %c0_0] : memref<2x84xf32, #tpu.memory_space<vmem>>, vector<2x84xf32>
    %c0_1 = arith.constant 0 : index
    %c0_2 = arith.constant 0 : index
    %1 = vector.load %arg2[%c0_1, %c0_2] : memref<84x128xf32, #tpu.memory_space<vmem>>, vector<84x128xf32>
    %c0_3 = arith.constant 0 : index
    %c0_4 = arith.constant 0 : index
    %2 = vector.load %arg3[%c0_3, %c0_4] : memref<1x128xf32, #tpu.memory_space<vmem>>, vector<1x128xf32>
    %cst = arith.constant dense<0.000000e+00> : vector<2x128xf32>
    %3 = tpu.matmul %0, %1, %cst {dimension_numbers = #tpu.dot_dimension_numbers<[1], [0], [0], [1], [0, 0, 1, 1], [], []>} : vector<2x84xf32>, vector<84x128xf32>, vector<2x128xf32> -> vector<2x128xf32>
    %4 = vector.broadcast %2 : vector<1x128xf32> to vector<2x128xf32>
    %5 = arith.addf %3, %4 : vector<2x128xf32>
    %cst_5 = arith.constant dense<0xFF800000> : vector<2xf32>
    %6 = vector.multi_reduction <maximumf>, %5, %cst_5 [1] : vector<2x128xf32> to vector<2xf32>
    %7 = vector.shape_cast %6 : vector<2xf32> to vector<2x1xf32>
    %8 = vector.broadcast %7 : vector<2x1xf32> to vector<2x128xf32>
    %9 = arith.subf %5, %8 : vector<2x128xf32>
    %10 = math.exp %9 : vector<2x128xf32>
    %cst_6 = arith.constant 1.000000e+00 : f32
    %11 = vector.broadcast %cst_6 : f32 to vector<128x1xf32>
    %cst_7 = arith.constant dense<0.000000e+00> : vector<2x1xf32>
    %12 = tpu.matmul %10, %11, %cst_7 {dimension_numbers = #tpu.dot_dimension_numbers<[1], [0], [0], [1], [0, 0, 1, 1], [], []>} : vector<2x128xf32>, vector<128x1xf32>, vector<2x1xf32> -> vector<2x1xf32>
    %13 = math.log %12 : vector<2x1xf32>
    %14 = vector.broadcast %13 : vector<2x1xf32> to vector<2x128xf32>
    %15 = arith.subf %9, %14 : vector<2x128xf32>
    %16 = vector.extract_strided_slice %15 {offsets = [0, 0], sizes = [2, 62], strides = [1, 1]} : vector<2x128xf32> to vector<2x62xf32>
    %c0_8 = arith.constant 0 : index
    %c0_9 = arith.constant 0 : index
    %17 = vector.load %arg4[%c0_8, %c0_9] : memref<2x62xf32, #tpu.memory_space<vmem>>, vector<2x62xf32>
    tpu.vector_store %arg4[%c0_8, %c0_9], %16 {strides = array<i32>} : memref<2x62xf32, #tpu.memory_space<vmem>>, vector<2x62xf32>,
    return
  }
  func.func @transform_0(%arg0: i32) -> (i32, i32) {
    %c0_i32 = arith.constant 0 : i32
    %c0_i32_0 = arith.constant 0 : i32
    return %arg0, %c0_i32 : i32, i32
  }
  func.func @transform_1(%arg0: i32) -> (i32, i32) {
    %c0_i32 = arith.constant 0 : i32
    %c0_i32_0 = arith.constant 0 : i32
    %c0_i32_1 = arith.constant 0 : i32
    return %c0_i32, %c0_i32_0 : i32, i32
  }
  func.func @transform_2(%arg0: i32) -> (i32, i32) {
    %c0_i32 = arith.constant 0 : i32
    %c0_i32_0 = arith.constant 0 : i32
    %c0_i32_1 = arith.constant 0 : i32
    return %c0_i32, %c0_i32_0 : i32, i32
  }
  func.func @transform_3(%arg0: i32) -> (i32, i32) {
    %c0_i32 = arith.constant 0 : i32
    %c0_i32_0 = arith.constant 0 : i32
    return %arg0, %c0_i32 : i32, i32
  }
}

</mosaic_0001>

<llo_original>
// kernel: layer6_forward.1
$region0: #{layer6_forward.1}
  #allocation0 [shape = 'u32[]', space=smem, size = 0x4, offset = 0x4, fixed_abs, tag = 'smem constant byte address 0x4 - core index']
  #allocation1 [shape = 'u32[144,128]{1,0:T(1,128)}', space=vmem, size = 0x12000, scoped, tag = 'internal scratch']
  %s0 = inlined_call_operand.vmem [shape: f32[2,84], index: 0, kind: input, shape index: {}]
  %s1 = inlined_call_operand.vmem [shape: f32[84,128], index: 1, kind: input, shape index: {}]
  %s2 = inlined_call_operand.vmem [shape: f32[1,128], index: 2, kind: input, shape index: {}]
  %s3 = inlined_call_operand.hbm [shape: f32[2,62], index: 3, kind: output, shape index: {}]
  %s4 = sld [smem:[#allocation0]]
  $region22: #{layer6_forward.1} parent=0
    _
  %s6 = ssub.s32 1, %s4
  %s7 = scalar_select 0, %s6, %s4
  $region1: #{layer6_forward.1} parent=0
    #allocation2 [shape = 'u8[1024]{0}', space=vmem, size = 0x400, scoped, tag = 'output window, operand 0, single buffered']
    #allocation3 [shape = 's32[1]{0}', space=sflag, size = 0x4, scoped, tag = 'scoped memory for layer6_forward.1']
    %8 = vsyncpa [#allocation3], 0
    // Predicated region
    $region2: #{layer6_forward.1} parent=1 // pred_check
      _
    $region3: #{layer6_forward.1} parent=1 // pred_check_branch
      %10 = sbr.rel (0) target = $region5
    $region4: #{layer6_forward.1} parent=1 // pred_region
      _
    $region5: #{layer6_forward.1} parent=1 // pred_fallthru
      _
    // Predicated region
    $region6: #{layer6_forward.1} parent=1 // pred_check
      _
    $region7: #{layer6_forward.1} parent=1 // pred_check_branch
      %12 = sbr.rel (0) target = $region9
    $region8: #{layer6_forward.1} parent=1 // pred_region
      _
    $region9: #{layer6_forward.1} parent=1 // pred_fallthru
      _
    // Predicated region
    $region10: #{layer6_forward.1} parent=1 // pred_check
      _
    $region11: #{layer6_forward.1} parent=1 // pred_check_branch
      %14 = sbr.rel (0) target = $region13
    $region12: #{layer6_forward.1} parent=1 // pred_region
      _
    $region13: #{layer6_forward.1} parent=1 // pred_fallthru
      _
    %v15 = vld [vmem:[%s0] sm:$0x3]
    %v16 = vld [vmem:[%s1] sm:$0xff]
    %v17 = vld [vmem:[%s1 + $0x8] sm:$0xff]
    %v18 = vld [vmem:[%s1 + $0x10] sm:$0xff]
    %v19 = vld [vmem:[%s1 + $0x18] sm:$0xff]
    %v20 = vld [vmem:[%s1 + $0x20] sm:$0xff]
    %v21 = vld [vmem:[%s1 + $0x28] sm:$0xff]
    %v22 = vld [vmem:[%s1 + $0x30] sm:$0xff]
    %v23 = vld [vmem:[%s1 + $0x38] sm:$0xff]
    %v24 = vld [vmem:[%s1 + $0x40] sm:$0xff]
    %v25 = vld [vmem:[%s1 + $0x48] sm:$0xff]
    %v26 = vld [vmem:[%s1 + $0x50] sm:$0xf]
    %v27 = vld [vmem:[%s2] sm:$0x1]
    %v29 = vlaneseq
    %v30 = vshrl.u32 %v29, 7
    %v31 = vsub.s32 0, %v30
    %v32 = vrot.slane %v27, %v31
    %vm34 = vcmask 687104
    %v36 = vsel %vm34, %v15, 0
    %vm38 = vcmask 1043456
    %v40 = vsel %vm38, %v26, 0
    %42 = vmatprep.subr.mxu0 0.0
    %43 = vmatpush1.msra.mxu0 %v16
    %44 = vmatprep.subr.mxu0 0.0
    %45 = vmatpush1.msra.mxu0 %v17
    %46 = vmatprep.subr.mxu0 0.0
    %47 = vmatpush1.msra.mxu0 %v18
    %48 = vmatprep.subr.mxu0 0.0
    %49 = vmatpush1.msra.mxu0 %v19
    %50 = vmatprep.subr.mxu0 0.0
    %51 = vmatpush1.msra.mxu0 %v20
    %52 = vmatprep.subr.mxu0 0.0
    %53 = vmatpush1.msra.mxu0 %v21
    %54 = vmatprep.subr.mxu0 0.0
    %55 = vmatpush1.msra.mxu0 %v22
    %56 = vmatprep.subr.mxu0 0.0
    %57 = vmatpush1.msra.mxu0 %v23
    %58 = vmatprep.subr.mxu0 0.0
    %59 = vmatpush1.msra.mxu0 %v24
    %60 = vmatprep.subr.mxu0 0.0
    %61 = vmatpush1.msra.mxu0 %v25
    %62 = vmatprep.subr.mxu0 0.0
    %63 = vmatpush1.msra.mxu0 %v40
    %64 = vmatprep.subr.mxu0 0.0
    %65 = vmatpush1.msra.mxu0 0.0
    %66 = vmatprep.subr.mxu0 0.0
    %67 = vmatpush1.msra.mxu0 0.0
    %68 = vmatprep.subr.mxu0 0.0
    %69 = vmatpush1.msra.mxu0 0.0
    %70 = vmatprep.subr.mxu0 0.0
    %71 = vmatpush1.msra.mxu0 0.0
    %72 = vmatprep.subr.mxu0 0.0
    %73 = vmatpush1.msra.mxu0 0.0
    %74 = vmatprep.subr.mxu0 0.0
    %75 = vmatpush1.msra.mxu0 0.0
    %76 = vmatprep.subr.mxu0 0.0
    %77 = vmatpush1.msra.mxu0 0.0
    %78 = vmatprep.subr.mxu0 0.0
    %79 = vmatpush1.msra.mxu0 0.0
    %80 = vmatprep.subr.mxu0 0.0
    %81 = vmatpush1.msra.mxu0 0.0
    %82 = vmatprep.subr.mxu0 0.0
    %83 = vmatpush1.msra.mxu0 0.0
    %84 = vmatprep.subr.mxu0 0.0
    %85 = vmatpush1.msra.mxu0 0.0
    %86 = vmatprep.subr.mxu0 0.0
    %87 = vmatpush1.msra.mxu0 0.0
    %88 = vmatprep.subr.mxu0 0.0
    %89 = vmatpush1.msra.mxu0 0.0
    %90 = vmatprep.subr.mxu0 0.0
    %91 = vmatpush1.msra.mxu0 0.0
    %92 = vmatprep.subr.mxu0 0.0
    %93 = vmatpush1.msra.mxu0 0.0
    %94 = vmatprep.subr.mxu0 0.0
    %95 = vmatpush1.msra.mxu0 0.0
    %96 = vmatprep.subr.mxu0 0.0
    %97 = vmatpush1.msra.mxu0 0.0
    %98 = vmatprep.subr.mxu0 0.0
    %99 = vmatpush1.msra.mxu0 0.0
    %100 = vmatprep.subr.mxu0 0.0
    %101 = vmatpush1.msra.mxu0 0.0
    %102 = vmatprep.subr.mxu0 0.0
    %103 = vmatpush1.msra.mxu0 0.0
    %104 = vmatprep.subr.mxu0 0.0
    %105 = vmatpush1.msra.mxu0 0.0
    %106 = vmatprep.mubr.f32.mxu0 0.0
    %107 = vmatmul.mubr.f32.gmra.mrb[0].mxu0 %v36
    %v108 = vpop.f32.mrb[0].mxu0
    %v109 = vadd.f32 %v32, %v108
    %v110 = vpop.f32.mrb[0].mxu0
    %111 = vdwg.mxu0
    %vm112 = vcmask 1041408
    %v113 = vsel %vm112, %v109, -inf
    %114 = vmax.xlane.f32.xlu0 %v113
    %v115 = vpop.xlane.xlu0 %114
    %v116 = vsub.f32 %v109, %v115
    %v117 = vmul.f32 %v116, 1.442695
    %v118 = vpow.pop %v117
    %119 = vmatprep.subr.mxu0 0.0
    %120 = vmatpush1.msra.mxu0 1.0
    %121 = vmatprep.subr.mxu0 0.0
    %122 = vmatpush1.msra.mxu0 1.0
    %123 = vmatprep.subr.mxu0 0.0
    %124 = vmatpush1.msra.mxu0 1.0
    %125 = vmatprep.subr.mxu0 0.0
    %126 = vmatpush1.msra.mxu0 1.0
    %127 = vmatprep.subr.mxu0 0.0
    %128 = vmatpush1.msra.mxu0 1.0
    %129 = vmatprep.subr.mxu0 0.0
    %130 = vmatpush1.msra.mxu0 1.0
    %131 = vmatprep.subr.mxu0 0.0
    %132 = vmatpush1.msra.mxu0 1.0
    %133 = vmatprep.subr.mxu0 0.0
    %134 = vmatpush1.msra.mxu0 1.0
    %135 = vmatprep.subr.mxu0 0.0
    %136 = vmatpush1.msra.mxu0 1.0
    %137 = vmatprep.subr.mxu0 0.0
    %138 = vmatpush1.msra.mxu0 1.0
    %139 = vmatprep.subr.mxu0 0.0
    %140 = vmatpush1.msra.mxu0 1.0
    %141 = vmatprep.subr.mxu0 0.0
    %142 = vmatpush1.msra.mxu0 1.0
    %143 = vmatprep.subr.mxu0 0.0
    %144 = vmatpush1.msra.mxu0 1.0
    %145 = vmatprep.subr.mxu0 0.0
    %146 = vmatpush1.msra.mxu0 1.0
    %147 = vmatprep.subr.mxu0 0.0
    %148 = vmatpush1.msra.mxu0 1.0
    %149 = vmatprep.subr.mxu0 0.0
    %150 = vmatpush1.msra.mxu0 1.0
    %151 = vmatprep.subr.mxu0 0.0
    %152 = vmatpush1.msra.mxu0 0.0
    %153 = vmatprep.subr.mxu0 0.0
    %154 = vmatpush1.msra.mxu0 0.0
    %155 = vmatprep.subr.mxu0 0.0
    %156 = vmatpush1.msra.mxu0 0.0
    %157 = vmatprep.subr.mxu0 0.0
    %158 = vmatpush1.msra.mxu0 0.0
    %159 = vmatprep.subr.mxu0 0.0
    %160 = vmatpush1.msra.mxu0 0.0
    %161 = vmatprep.subr.mxu0 0.0
    %162 = vmatpush1.msra.mxu0 0.0
    %163 = vmatprep.subr.mxu0 0.0
    %164 = vmatpush1.msra.mxu0 0.0
    %165 = vmatprep.subr.mxu0 0.0
    %166 = vmatpush1.msra.mxu0 0.0
    %167 = vmatprep.subr.mxu0 0.0
    %168 = vmatpush1.msra.mxu0 0.0
    %169 = vmatprep.subr.mxu0 0.0
    %170 = vmatpush1.msra.mxu0 0.0
    %171 = vmatprep.subr.mxu0 0.0
    %172 = vmatpush1.msra.mxu0 0.0
    %173 = vmatprep.subr.mxu0 0.0
    %174 = vmatpush1.msra.mxu0 0.0
    %175 = vmatprep.subr.mxu0 0.0
    %176 = vmatpush1.msra.mxu0 0.0
    %177 = vmatprep.subr.mxu0 0.0
    %178 = vmatpush1.msra.mxu0 0.0
    %179 = vmatprep.subr.mxu0 0.0
    %180 = vmatpush1.msra.mxu0 0.0
    %181 = vmatprep.subr.mxu0 0.0
    %182 = vmatpush1.msra.mxu0 0.0
    %183 = vmatprep.mubr.f32.mxu0 0.0
    %184 = vmatmul.mubr.f32.gmra.mrb[0].mxu0 %v118
    %v185 = vpop.f32.mrb[0].mxu0
    %v186 = vadd.f32 0.0, %v185
    %v187 = vpop.f32.mrb[0].mxu0
    %188 = vdwg.mxu0
    %v189 = vlog2.pop %v186
    %v190 = vmul.f32 %v189, 0.6931472
    %192 = vset.pattern.permute.xlu0 0
    %193 = vperm.xlu0 %192, %v190
    %v194 = vpop.permute.xlu0 %193
    %v196 = vsub.f32 %v116, %v194
    %vm197 = vcmask 500736
    %198 = vst.msk [vmem:[#allocation2] sm:$0x3] %vm197, %v196
    // Predicated region
    $region14: #{layer6_forward.1} parent=1 // pred_check
      _
    $region15: #{layer6_forward.1} parent=1 // pred_check_branch
      %200 = sbr.rel (0) target = $region17
    $region16: #{layer6_forward.1} parent=1 // pred_region
      %s202 = ssub.s32 32, 32
      %203 = vsyncadd [#allocation3], %s202
      %s205 = sshll.u32 [#allocation2], 4
      %s206 = int_to_ptr.vmem [resolvable:$true] %s205
      %208 = dma.vmem_to_hbm [thread:$0]  %s206, 32, %s3, [#allocation3]
    $region17: #{layer6_forward.1} parent=1 // pred_fallthru
      _
    // Predicated region
    $region18: #{layer6_forward.1} parent=1 // pred_check
      _
    $region19: #{layer6_forward.1} parent=1 // pred_check_branch
      %210 = sbr.rel (0) target = $region21
    $region20: #{layer6_forward.1} parent=1 // pred_region
      %211 = dma.done [#allocation3], 32
    $region21: #{layer6_forward.1} parent=1 // pred_fallthru
      _
    %212 = vsyncpa [#allocation3], 1

</llo_original>
